<compile_context>
chip_gen: v5e
topology: v5e:2x2
jax: 0.10.0
libtpu: 0.0.40
codegen_flags: <defaults>
</compile_context>

<pallas_src>
import functools

import jax
import jax.numpy as jnp
from jax import lax
from jax.experimental import pallas as pl
from jax.experimental.pallas import tpu as pltpu


# --------------------------------------------------------------------------
# Prep kernel: L2-normalize prototype rows once, emit bf16 (single block).
# --------------------------------------------------------------------------
def _normalize_protos_kernel(p_ref, pn_ref):
    p = p_ref[...].astype(jnp.float32)                                  # (C, D)
    inv = lax.rsqrt(jnp.sum(p * p, axis=1, keepdims=True) + 1e-12)      # (C, 1)
    pn_ref[...] = (p * inv).astype(pn_ref.dtype)


# --------------------------------------------------------------------------
# Main kernel: one batch tile -> one scalar partial loss.
# --------------------------------------------------------------------------
def _comp_ng_kernel(x_ref, pn_ref, lbl_ref, out_ref, *, scale):
    x = x_ref[...].astype(jnp.bfloat16)          # (tb, D)
    pn = pn_ref[...]                             # (C, D) bf16, VMEM-resident
    lbl = lbl_ref[...]                           # (tb, 1) int32

    # features @ pn.T on the MXU: bf16 operands, f32 accumulation.
    dots = lax.dot_general(
        x, pn,
        dimension_numbers=(((1,), (1,)), ((), ())),
        preferred_element_type=jnp.float32)      # (tb, C) f32

    # Positive mask built in-kernel (no (B, C) one-hot through HBM).
    # Padded rows carry label -1 and therefore contribute exactly zero.
    cls_ids = lax.broadcasted_iota(jnp.int32, dots.shape, 1)
    picked = jnp.where(cls_ids == lbl, dots, 0.0)

    # Single scalar per batch tile; scale applied after the reduction.
    out_ref[0, 0] = jnp.sum(picked) * scale


def _round_up(x, m):
    return ((x + m - 1) // m) * m


def _pick_batch_tile(batch, cap=512, align=16):
    """Batch tile: <= cap, multiple of 16 (bf16 sublane packing); pad B up."""
    if batch >= cap:
        return cap
    return _round_up(batch, align)


def comp_ng_loss(features, prototypes, labels, *, num_classes,
                 temperature=0.1, base_temperature=0.1, tb=None):
    """CompNGLoss forward pass on TPU via Pallas.

    features:   (B, D) float32 or bfloat16 embeddings
    prototypes: (C, D) float32 class prototypes
    labels:     (B,)   int    class ids
    """
    B, D = features.shape
    C, D2 = prototypes.shape
    assert D == D2 and C == num_classes

    # ---- 1) normalized bf16 prototypes (tiny one-shot kernel) -------------
    pn = pl.pallas_call(
        _normalize_protos_kernel,
        out_shape=jax.ShapeDtypeStruct((C, D), jnp.bfloat16),
    )(prototypes)

    # ---- 2) batch-tiled masked-dot reduction -------------------------------
    tb = _pick_batch_tile(B) if tb is None else tb
    assert tb % 8 == 0, "batch tile must be a multiple of 8"
    n_b = pl.cdiv(B, tb)
    b_pad = n_b * tb

    labels_col = labels.reshape(B, 1).astype(jnp.int32)    # only 4*B bytes
    x = features
    if b_pad != B:
        x = jnp.pad(x, ((0, b_pad - B), (0, 0)))
        labels_col = jnp.pad(labels_col, ((0, b_pad - B), (0, 0)),
                             constant_values=-1)           # -> zero contribution

    # loss = -(T/base_T) * (1/B) * sum_{i,c} mask * (x . pn) / T
    scale = -(float(temperature) / float(base_temperature)) / (float(temperature) * B)

    kernel = functools.partial(_comp_ng_kernel, scale=scale)

    # VMEM budget: double-buffered feature tile + resident bf16 protos + labels.
    itemsize = jnp.dtype(x.dtype).itemsize
    vmem_est = 2 * tb * D * itemsize + 2 * C * D * 2 + 2 * tb * 4 + (1 << 20)
    vmem_limit = int(min(64 * 1024 * 1024, max(2 * vmem_est, 32 * 1024 * 1024)))

    partials = pl.pallas_call(
        kernel,
        out_shape=jax.ShapeDtypeStruct((n_b, 1), jnp.float32),
        grid=(n_b,),
        in_specs=[
            pl.BlockSpec((tb, D), lambda b: (b, 0)),   # features: one pass over HBM
            pl.BlockSpec((C, D), lambda b: (0, 0)),    # protos: VMEM-resident
            pl.BlockSpec((tb, 1), lambda b: (b, 0)),   # labels column
        ],
        # One scalar partial per batch tile lives naturally in SMEM.
        out_specs=pl.BlockSpec((1, 1), lambda b: (b, 0),
                               memory_space=pltpu.SMEM),
        compiler_params=pltpu.CompilerParams(
            dimension_semantics=("parallel",),          # shard batch tiles over TCs
            vmem_limit_bytes=vmem_limit,
        ),
    )(x, pn, labels_col)

    # Tiny (n_b,) reduction outside the kernel.
    return jnp.sum(partials)


# --------------------------------------------------------------------------
# Plain-JAX references (module-faithful f32 and bf16-MXU-matched).
# --------------------------------------------------------------------------
def _reference_loss(features, prototypes, labels, *, num_classes,
                    temperature, base_temperature, bf16_matmul):
    inv = lax.rsqrt(jnp.sum(prototypes * prototypes, axis=1, keepdims=True) + 1e-12)
    pn = prototypes * inv
    if bf16_matmul:
        dots = lax.dot_general(
            features.astype(jnp.bfloat16), pn.astype(jnp.bfloat16),
            dimension_numbers=(((1,), (1,)), ((), ())),
            preferred_element_type=jnp.float32)
    else:
        dots = features @ pn.T
    mask = (labels[:, None] == jnp.arange(num_classes)[None, :]).astype(jnp.float32)
    feat_dot_prototype = dots / temperature
    mean_log_prob_pos = jnp.sum(mask * feat_dot_prototype, axis=1)
    return -(temperature / base_temperature) * jnp.mean(mean_log_prob_pos)


if __name__ == "__main__":
    num_classes = 8
    feat_dim = 32
    batch = 20            # deliberately not a tile multiple: exercises padding path
    temperature = 0.1
    base_temperature = 0.1

    key = jax.random.PRNGKey(0)
    kf, kp, kl = jax.random.split(key, 3)
    features = jax.random.normal(kf, (batch, feat_dim), jnp.float32)
    prototypes = jax.random.normal(kp, (num_classes, feat_dim), jnp.float32)
    labels = jax.random.randint(kl, (batch,), 0, num_classes, jnp.int32)

    # tb=8 -> 3 batch tiles (one padded) exercises the 1-D parallel grid.
    loss = comp_ng_loss(features, prototypes, labels,
                        num_classes=num_classes,
                        temperature=temperature,
                        base_temperature=base_temperature,
                        tb=8)
    loss = jax.block_until_ready(loss)

    # Tight check vs. a precision-matched reference (same bf16 MXU operands).
    ref_matched = _reference_loss(features, prototypes, labels,
                                  num_classes=num_classes,
                                  temperature=temperature,
                                  base_temperature=base_temperature,
                                  bf16_matmul=True)
    # Looser check vs. the module-faithful f32 reference; gap is bf16 rounding.
    ref_f32 = _reference_loss(features, prototypes, labels,
                              num_classes=num_classes,
                              temperature=temperature,
                              base_temperature=base_temperature,
                              bf16_matmul=False)

    assert jnp.allclose(loss, ref_matched, rtol=2e-3, atol=2e-3), (loss, ref_matched)
    assert jnp.allclose(loss, ref_f32, rtol=5e-2, atol=5e-2), (loss, ref_f32)

    print("KERNEL_OK")
</pallas_src>

<mosaic_0001>
module attributes {stable_mosaic.version = 11 : i64} {
  func.func @_normalize_protos_kernel(%arg0: memref<8x32xf32, #tpu.memory_space<vmem>>, %arg1: memref<8x32xbf16, #tpu.memory_space<vmem>>) attributes {dimension_semantics = [], scalar_prefetch = 0 : i64, scratch_operands = 0 : i64, tpu.core_type = #tpu.core_type<tc>} {
    %c0 = arith.constant 0 : index
    %c0_0 = arith.constant 0 : index
    %0 = vector.load %arg0[%c0, %c0_0] : memref<8x32xf32, #tpu.memory_space<vmem>>, vector<8x32xf32>
    %1 = arith.mulf %0, %0 : vector<8x32xf32>
    %cst = arith.constant dense<0.000000e+00> : vector<8xf32>
    %2 = vector.multi_reduction <add>, %1, %cst [1] : vector<8x32xf32> to vector<8xf32>
    %3 = vector.shape_cast %2 : vector<8xf32> to vector<8x1xf32>
    %cst_1 = arith.constant 9.99999996E-13 : f32
    %4 = vector.broadcast %cst_1 : f32 to vector<8x1xf32>
    %5 = arith.addf %3, %4 : vector<8x1xf32>
    %6 = math.rsqrt %5 : vector<8x1xf32>
    %7 = vector.broadcast %6 : vector<8x1xf32> to vector<8x32xf32>
    %8 = arith.mulf %0, %7 : vector<8x32xf32>
    %9 = arith.truncf %8 : vector<8x32xf32> to vector<8x32xbf16>
    %c0_2 = arith.constant 0 : index
    %c0_3 = arith.constant 0 : index
    %10 = vector.load %arg1[%c0_2, %c0_3] : memref<8x32xbf16, #tpu.memory_space<vmem>>, vector<8x32xbf16>
    tpu.vector_store %arg1[%c0_2, %c0_3], %9 {strides = array<i32>} : memref<8x32xbf16, #tpu.memory_space<vmem>>, vector<8x32xbf16>,
    return
  }
}

</mosaic_0001>

<llo_original>
// kernel: tpu_custom_call.1
$region0: #{tpu_custom_call.1}
  #allocation0 [shape = 'u32[]', space=smem, size = 0x4, offset = 0x4, fixed_abs, tag = 'smem constant byte address 0x4 - core index']
  #allocation1 [shape = 'u32[72,128]{1,0:T(1,128)}', space=vmem, size = 0x9000, scoped, tag = 'internal scratch']
  %s0 = inlined_call_operand.hbm [shape: f32[8,32], index: 0, kind: input, shape index: {}]
  %s1 = inlined_call_operand.hbm [shape: bf16[8,32], index: 1, kind: output, shape index: {}]
  %s2 = sld [smem:[#allocation0]]
  $region18: #{tpu_custom_call.1} parent=0
    _
  %s4 = ssub.s32 1, %s2
  %s5 = scalar_select 0, %s4, %s2
  $region1: #{tpu_custom_call.1} parent=0
    #allocation2 [shape = 'u8[4096]{0}', space=vmem, size = 0x1000, scoped, tag = 'input window, operand 0, single buffered']
    #allocation3 [shape = 's32[1]{0}', space=sflag, size = 0x4, scoped, tag = 'scoped memory for tpu_custom_call.1']
    #allocation4 [shape = 's32[1]{0}', space=sflag, size = 0x4, scoped, tag = 'scoped memory for tpu_custom_call.1']
    #allocation5 [shape = 'u8[2048]{0}', space=vmem, size = 0x800, scoped, tag = 'output window, operand 0, single buffered']
    %6 = vsyncpa [#allocation3], 0
    %7 = vsyncpa [#allocation4], 0
    // Predicated region
    $region2: #{tpu_custom_call.1} parent=1 // pred_check
      _
    $region3: #{tpu_custom_call.1} parent=1 // pred_check_branch
      %9 = sbr.rel (0) target = $region5
    $region4: #{tpu_custom_call.1} parent=1 // pred_region
      %11 = vsyncadd [#allocation3], 0
      %s13 = sshll.u32 %s0, 4
      %s14 = int_to_ptr.hbm [resolvable:$true] %s13
      %s15 = sshll.u32 [#allocation2], 4
      %s16 = int_to_ptr.vmem [resolvable:$true] %s15
      %18 = dma.hbm_to_vmem [thread:$0]  %s14, 128, %s16, [#allocation3]
    $region5: #{tpu_custom_call.1} parent=1 // pred_fallthru
      _
    // Predicated region
    $region6: #{tpu_custom_call.1} parent=1 // pred_check
      _
    $region7: #{tpu_custom_call.1} parent=1 // pred_check_branch
      %20 = sbr.rel (0) target = $region9
    $region8: #{tpu_custom_call.1} parent=1 // pred_region
      %22 = dma.done [#allocation3], 128
    $region9: #{tpu_custom_call.1} parent=1 // pred_fallthru
      _
    %v23 = vld [vmem:[#allocation2] sm:$0xff]
    %v24 = vmul.f32 %v23, %v23
    %vm25 = vcmask 261120
    %v26 = vsel %vm25, %v24, 0.0
    %27 = vadd.xlane.f32.xlu0 %v26
    %v28 = vpop.xlane.xlu0 %27
    %v29 = vadd.f32 %v28, 1e-12
    %v30 = vrsqrt.pop %v29
    %v31 = vmul.f32 %v30, %v29
    %v32 = vmul.f32 %v31, %v30
    %v33 = vmul.f32 0.5, %v32
    %v34 = vsub.f32 1.5, %v33
    %v35 = vmul.f32 %v30, %v34
    %vm36 = vweird.f32 %v29
    %vm37 = vweird.f32 %v30
    %vm38 = vmor %vm36, %vm37
    %v39 = vsel %vm38, %v30, %v35
    %v40 = vmul.f32 %v23, %v39
    %v41 = vpack.c.bf16 %v40, %v40
    %vm42 = vcmask 257024
    %43 = vst.msk [vmem:[#allocation5] sm:$0xf] %vm42, %v41
    // Predicated region
    $region10: #{tpu_custom_call.1} parent=1 // pred_check
      _
    $region11: #{tpu_custom_call.1} parent=1 // pred_check_branch
      %45 = sbr.rel (0) target = $region13
    $region12: #{tpu_custom_call.1} parent=1 // pred_region
      %47 = vsyncadd [#allocation4], 0
      %s49 = sshll.u32 [#allocation5], 4
      %s50 = int_to_ptr.vmem [resolvable:$true] %s49
      %s51 = sshll.u32 %s1, 4
      %s52 = int_to_ptr.hbm [resolvable:$true] %s51
      %54 = dma.vmem_to_hbm [thread:$0]  %s50, 64, %s52, [#allocation4]
    $region13: #{tpu_custom_call.1} parent=1 // pred_fallthru
      _
    // Predicated region
    $region14: #{tpu_custom_call.1} parent=1 // pred_check
      _
    $region15: #{tpu_custom_call.1} parent=1 // pred_check_branch
      %56 = sbr.rel (0) target = $region17
    $region16: #{tpu_custom_call.1} parent=1 // pred_region
      %58 = dma.done [#allocation4], 64
    $region17: #{tpu_custom_call.1} parent=1 // pred_fallthru
      _
    %59 = vsyncpa [#allocation3], 1
    %60 = vsyncpa [#allocation4], 1

</llo_original>
